<compile_context>
chip_gen: v7x
topology: tpu7x:2x2x1
jax: 0.10.0
libtpu: 0.0.40
codegen_flags: <defaults>
</compile_context>

<pallas_src>
import jax
import jax.numpy as jnp
from jax.experimental import pallas as pl
from jax.experimental.pallas import tpu as pltpu


def _round_up(v, m):
    return ((v + m - 1) // m) * m


def _choose_bt(B, N, bytes_per_elem, vmem_budget=8 << 20):
    """Pick the per-grid-step batch pack Bt (a divisor of B)."""
    divisors = [d for d in range(1, B + 1) if B % d == 0]
    # Keep the double-buffered (Bt, N, N) adj block modest.
    max_rows = max(1, vmem_budget // max(1, 2 * N * N * bytes_per_elem))
    feasible = [d for d in divisors if d <= max_rows] or [1]
    # Prefer >= 2 grid steps when possible (v7x has 2 TensorCores).
    pref = [d for d in feasible if B // d >= 2] or feasible
    target = max(1, -(-256 // max(N, 1)))  # aim for Bt*N >= 256 MXU rows
    for d in pref:
        if d >= target:
            return d
    return pref[-1]


def gcn_layer(x, adj, w_a, b_a, w_d, b_d, *, compute_dtype=jnp.bfloat16):
    """x: (B, N, F_in), adj: (B, N, N).
    w_a: (F_out, F_in), b_a: (F_out,), w_d: (F_out, F_out), b_d: (F_out,)."""
    B, N, F_in = x.shape
    F_out = w_a.shape[0]
    assert adj.shape == (B, N, N)

    N_pad = _round_up(N, 8)            # sublane-aligned node count
    F_pad = _round_up(F_out, 128)      # lane-dense output width
    Bt = _choose_bt(B, N_pad, jnp.dtype(compute_dtype).itemsize)
    G = B // Bt
    BtN = Bt * N_pad

    # Glue: weights pre-transposed to (in, out); linear_d padded to F_pad
    # output lanes with zero columns (relu(0*x + 0) == 0, sliced off below).
    wa_t = jnp.asarray(w_a, jnp.float32).T.astype(compute_dtype)      # (F_in, F_out)
    wd_t = jnp.asarray(w_d, jnp.float32).T                            # (F_out, F_out)
    wd_t = jnp.pad(wd_t, ((0, 0), (0, F_pad - F_out))).astype(compute_dtype)
    ba = jnp.asarray(b_a, jnp.float32).reshape(1, F_out)
    bd = jnp.pad(jnp.asarray(b_d, jnp.float32), (0, F_pad - F_out)).reshape(1, F_pad)

    # Zero-pad nodes: padded adj rows/cols and x rows are zero, so padded
    # output rows are relu(b_d) garbage that the wrapper slices off.
    xc = jnp.pad(jnp.asarray(x, compute_dtype), ((0, 0), (0, N_pad - N), (0, 0)))
    adjc = jnp.pad(jnp.asarray(adj, compute_dtype),
                   ((0, 0), (0, N_pad - N), (0, N_pad - N)))

    # Static choice: put the cheaper feature width on the N^2 contraction.
    reassociate = F_in < F_out

    def kernel(x_ref, adj_ref, wa_ref, ba_ref, wd_ref, bd_ref, out_ref):
        xb = x_ref[...]      # (Bt, N_pad, F_in)   bf16
        ab = adj_ref[...]    # (Bt, N_pad, N_pad)  bf16

        if not reassociate:
            # linear_a on the packed (Bt*N_pad, F_in) slab, then per-graph adj matmul.
            h_a = jnp.dot(xb.reshape(BtN, F_in), wa_ref[...],
                          preferred_element_type=jnp.float32) + ba_ref[...]
            conv = jnp.einsum(
                "bnm,bmo->bno", ab,
                h_a.reshape(Bt, N_pad, F_out).astype(compute_dtype),
                preferred_element_type=jnp.float32)            # (Bt, N_pad, F_out) f32
        else:
            # adj @ (x Wa^T + b) == (adj @ x) Wa^T + rowsum(adj) * b
            ax = jnp.einsum("bnm,bmf->bnf", ab, xb,
                            preferred_element_type=jnp.float32)  # (Bt, N_pad, F_in) f32
            rowsum = jnp.sum(ab.astype(jnp.float32), axis=-1,
                             keepdims=True).reshape(BtN, 1)
            conv = (jnp.dot(ax.reshape(BtN, F_in).astype(compute_dtype),
                            wa_ref[...], preferred_element_type=jnp.float32)
                    + rowsum * ba_ref[...]).reshape(Bt, N_pad, F_out)

        act = jnp.maximum(conv, 0.0).reshape(BtN, F_out).astype(compute_dtype)
        h_d = jnp.dot(act, wd_ref[...],
                      preferred_element_type=jnp.float32) + bd_ref[...]
        out_ref[...] = jnp.maximum(h_d, 0.0).astype(out_ref.dtype)

    out_flat = pl.pallas_call(
        kernel,
        out_shape=jax.ShapeDtypeStruct((B * N_pad, F_pad), jnp.float32),
        grid_spec=pltpu.PrefetchScalarGridSpec(
            num_scalar_prefetch=0,
            grid=(G,),
            in_specs=[
                pl.BlockSpec((Bt, N_pad, F_in), lambda g: (g, 0, 0)),    # x
                pl.BlockSpec((Bt, N_pad, N_pad), lambda g: (g, 0, 0)),   # adj
                pl.BlockSpec((F_in, F_out), lambda g: (0, 0)),           # W_a^T (resident)
                pl.BlockSpec((1, F_out), lambda g: (0, 0)),              # b_a
                pl.BlockSpec((F_out, F_pad), lambda g: (0, 0)),          # W_d^T (padded)
                pl.BlockSpec((1, F_pad), lambda g: (0, 0)),              # b_d (padded)
            ],
            out_specs=pl.BlockSpec((BtN, F_pad), lambda g: (g, 0)),      # lane-dense slab
        ),
        compiler_params=pltpu.CompilerParams(
            dimension_semantics=("parallel",),
            vmem_limit_bytes=48 * 1024 * 1024,
        ),
    )(xc, adjc, wa_t, ba, wd_t, bd)

    return out_flat.reshape(B, N_pad, F_pad)[:, :N, :F_out]


def gcn_layer_ref(x, adj, w_a, b_a, w_d, b_d):
    """Pure-JAX f32 reference mirroring the PyTorch forward exactly."""
    h_a = jnp.einsum("bnf,of->bno", x, w_a) + b_a
    conv = jnp.einsum("bnm,bmo->bno", adj, h_a)
    act = jnp.maximum(conv, 0.0)
    h_d = jnp.einsum("bno,po->bnp", act, w_d) + b_d
    return jnp.maximum(h_d, 0.0)


def _make_inputs(key, B, N, F_in, F_out):
    kx, kadj, kwa, kba, kwd, kbd = jax.random.split(key, 6)
    x = jax.random.normal(kx, (B, N, F_in), dtype=jnp.float32)
    # Symmetric-ish normalized adjacency with self loops (typical GCN input).
    a = jax.random.uniform(kadj, (B, N, N), dtype=jnp.float32)
    a = 0.5 * (a + jnp.swapaxes(a, -1, -2)) + jnp.eye(N)[None]
    adj = a / jnp.sum(a, axis=-1, keepdims=True)
    bound_a = 1.0 / (F_in ** 0.5)
    bound_d = 1.0 / (F_out ** 0.5)
    w_a = jax.random.uniform(kwa, (F_out, F_in), minval=-bound_a, maxval=bound_a)
    b_a = jax.random.uniform(kba, (F_out,), minval=-bound_a, maxval=bound_a)
    w_d = jax.random.uniform(kwd, (F_out, F_out), minval=-bound_d, maxval=bound_d)
    b_d = jax.random.uniform(kbd, (F_out,), minval=-bound_d, maxval=bound_d)
    return x, adj, w_a, b_a, w_d, b_d


if __name__ == "__main__":
    key = jax.random.PRNGKey(0)
    k1, k2 = jax.random.split(key, 2)

    # Case 1: F_out <= F_in path (standard association), batch-packed.
    x, adj, w_a, b_a, w_d, b_d = _make_inputs(k1, B=8, N=8, F_in=32, F_out=32)
    out = jax.block_until_ready(gcn_layer(x, adj, w_a, b_a, w_d, b_d))
    ref = gcn_layer_ref(x, adj, w_a, b_a, w_d, b_d)
    assert out.shape == ref.shape
    assert jnp.allclose(out, ref, atol=3e-2, rtol=3e-2), "mismatch vs reference (case 1)"

    # Case 2: F_in < F_out path (reassociated (adj @ x) @ W_a^T).
    x, adj, w_a, b_a, w_d, b_d = _make_inputs(k2, B=4, N=8, F_in=16, F_out=32)
    out = jax.block_until_ready(gcn_layer(x, adj, w_a, b_a, w_d, b_d))
    ref = gcn_layer_ref(x, adj, w_a, b_a, w_d, b_d)
    assert out.shape == ref.shape
    assert jnp.allclose(out, ref, atol=3e-2, rtol=3e-2), "mismatch vs reference (case 2)"

    print("KERNEL_OK")
</pallas_src>

<mosaic_0001>
module attributes {stable_mosaic.version = 11 : i64} {
  func.func @kernel(%arg0: i32, %arg1: memref<4x8x32xbf16, #tpu.memory_space<vmem>>, %arg2: memref<4x8x8xbf16, #tpu.memory_space<vmem>>, %arg3: memref<32x32xbf16, #tpu.memory_space<vmem>>, %arg4: memref<1x32xf32, #tpu.memory_space<vmem>>, %arg5: memref<32x128xbf16, #tpu.memory_space<vmem>>, %arg6: memref<1x128xf32, #tpu.memory_space<vmem>>, %arg7: memref<32x128xf32, #tpu.memory_space<vmem>>) attributes {dimension_semantics = [#tpu.dimension_semantics<parallel>], iteration_bounds = array<i64: 2>, scalar_prefetch = 0 : i64, scratch_operands = 0 : i64, tpu.core_type = #tpu.core_type<tc>, window_params = [{transform_indices = @transform_0, window_bounds = array<i64: 4, 8, 32>}, {transform_indices = @transform_1, window_bounds = array<i64: 4, 8, 8>}, {pipeline_mode = #tpu.pipeline_mode<synchronous>, transform_indices = @transform_2, window_bounds = array<i64: 32, 32>}, {pipeline_mode = #tpu.pipeline_mode<synchronous>, transform_indices = @transform_3, window_bounds = array<i64: 1, 32>}, {pipeline_mode = #tpu.pipeline_mode<synchronous>, transform_indices = @transform_4, window_bounds = array<i64: 32, 128>}, {pipeline_mode = #tpu.pipeline_mode<synchronous>, transform_indices = @transform_5, window_bounds = array<i64: 1, 128>}, {transform_indices = @transform_6, window_bounds = array<i64: 32, 128>}]} {
    %c0 = arith.constant 0 : index
    %c0_0 = arith.constant 0 : index
    %c0_1 = arith.constant 0 : index
    %0 = vector.load %arg1[%c0, %c0_0, %c0_1] : memref<4x8x32xbf16, #tpu.memory_space<vmem>>, vector<4x8x32xbf16>
    %c0_2 = arith.constant 0 : index
    %c0_3 = arith.constant 0 : index
    %c0_4 = arith.constant 0 : index
    %1 = vector.load %arg2[%c0_2, %c0_3, %c0_4] : memref<4x8x8xbf16, #tpu.memory_space<vmem>>, vector<4x8x8xbf16>
    %2 = vector.shape_cast %0 : vector<4x8x32xbf16> to vector<32x32xbf16>
    %c0_5 = arith.constant 0 : index
    %c0_6 = arith.constant 0 : index
    %3 = vector.load %arg3[%c0_5, %c0_6] : memref<32x32xbf16, #tpu.memory_space<vmem>>, vector<32x32xbf16>
    %cst = arith.constant dense<0.000000e+00> : vector<32x32xf32>
    %4 = tpu.matmul %2, %3, %cst {dimension_numbers = #tpu.dot_dimension_numbers<[1], [0], [0], [1], [0, 0, 1, 1], [], []>} : vector<32x32xbf16>, vector<32x32xbf16>, vector<32x32xf32> -> vector<32x32xf32>
    %c0_7 = arith.constant 0 : index
    %c0_8 = arith.constant 0 : index
    %5 = vector.load %arg4[%c0_7, %c0_8] : memref<1x32xf32, #tpu.memory_space<vmem>>, vector<1x32xf32>
    %6 = vector.broadcast %5 : vector<1x32xf32> to vector<32x32xf32>
    %7 = arith.addf %4, %6 : vector<32x32xf32>
    %8 = vector.shape_cast %7 : vector<32x32xf32> to vector<4x8x32xf32>
    %9 = arith.truncf %8 : vector<4x8x32xf32> to vector<4x8x32xbf16>
    "tpu.trace_start"() <{level = 10 : i32, message = "bnm,bmo->bno"}> : () -> ()
    %cst_9 = arith.constant dense<0.000000e+00> : vector<4x8x32xf32>
    %10 = tpu.matmul %1, %9, %cst_9 {dimension_numbers = #tpu.dot_dimension_numbers<[2], [1], [1], [2], [0, 0, 0, 1, 1, 2], [0], [0]>} : vector<4x8x8xbf16>, vector<4x8x32xbf16>, vector<4x8x32xf32> -> vector<4x8x32xf32>
    "tpu.trace_stop"() : () -> ()
    %cst_10 = arith.constant 0.000000e+00 : f32
    %11 = vector.broadcast %cst_10 : f32 to vector<4x8x32xf32>
    %12 = arith.maximumf %10, %11 : vector<4x8x32xf32>
    %13 = vector.shape_cast %12 : vector<4x8x32xf32> to vector<32x32xf32>
    %14 = arith.truncf %13 : vector<32x32xf32> to vector<32x32xbf16>
    %c0_11 = arith.constant 0 : index
    %c0_12 = arith.constant 0 : index
    %15 = vector.load %arg5[%c0_11, %c0_12] : memref<32x128xbf16, #tpu.memory_space<vmem>>, vector<32x128xbf16>
    %cst_13 = arith.constant dense<0.000000e+00> : vector<32x128xf32>
    %16 = tpu.matmul %14, %15, %cst_13 {dimension_numbers = #tpu.dot_dimension_numbers<[1], [0], [0], [1], [0, 0, 1, 1], [], []>} : vector<32x32xbf16>, vector<32x128xbf16>, vector<32x128xf32> -> vector<32x128xf32>
    %c0_14 = arith.constant 0 : index
    %c0_15 = arith.constant 0 : index
    %17 = vector.load %arg6[%c0_14, %c0_15] : memref<1x128xf32, #tpu.memory_space<vmem>>, vector<1x128xf32>
    %18 = vector.broadcast %17 : vector<1x128xf32> to vector<32x128xf32>
    %19 = arith.addf %16, %18 : vector<32x128xf32>
    %cst_16 = arith.constant 0.000000e+00 : f32
    %20 = vector.broadcast %cst_16 : f32 to vector<32x128xf32>
    %21 = arith.maximumf %19, %20 : vector<32x128xf32>
    %c0_17 = arith.constant 0 : index
    %c0_18 = arith.constant 0 : index
    %22 = vector.load %arg7[%c0_17, %c0_18] : memref<32x128xf32, #tpu.memory_space<vmem>>, vector<32x128xf32>
    tpu.vector_store %arg7[%c0_17, %c0_18], %21 {strides = array<i32>} : memref<32x128xf32, #tpu.memory_space<vmem>>, vector<32x128xf32>,
    return
  }
  func.func @transform_0(%arg0: i32) -> (i32, i32, i32) {
    %c0_i32 = arith.constant 0 : i32
    %c0_i32_0 = arith.constant 0 : i32
    %c0_i32_1 = arith.constant 0 : i32
    return %arg0, %c0_i32, %c0_i32_0 : i32, i32, i32
  }
  func.func @transform_1(%arg0: i32) -> (i32, i32, i32) {
    %c0_i32 = arith.constant 0 : i32
    %c0_i32_0 = arith.constant 0 : i32
    %c0_i32_1 = arith.constant 0 : i32
    return %arg0, %c0_i32, %c0_i32_0 : i32, i32, i32
  }
  func.func @transform_2(%arg0: i32) -> (i32, i32) {
    %c0_i32 = arith.constant 0 : i32
    %c0_i32_0 = arith.constant 0 : i32
    %c0_i32_1 = arith.constant 0 : i32
    return %c0_i32, %c0_i32_0 : i32, i32
  }
  func.func @transform_3(%arg0: i32) -> (i32, i32) {
    %c0_i32 = arith.constant 0 : i32
    %c0_i32_0 = arith.constant 0 : i32
    %c0_i32_1 = arith.constant 0 : i32
    return %c0_i32, %c0_i32_0 : i32, i32
  }
  func.func @transform_4(%arg0: i32) -> (i32, i32) {
    %c0_i32 = arith.constant 0 : i32
    %c0_i32_0 = arith.constant 0 : i32
    %c0_i32_1 = arith.constant 0 : i32
    return %c0_i32, %c0_i32_0 : i32, i32
  }
  func.func @transform_5(%arg0: i32) -> (i32, i32) {
    %c0_i32 = arith.constant 0 : i32
    %c0_i32_0 = arith.constant 0 : i32
    %c0_i32_1 = arith.constant 0 : i32
    return %c0_i32, %c0_i32_0 : i32, i32
  }
  func.func @transform_6(%arg0: i32) -> (i32, i32) {
    %c0_i32 = arith.constant 0 : i32
    %c0_i32_0 = arith.constant 0 : i32
    return %arg0, %c0_i32 : i32, i32
  }
}

</mosaic_0001>

<llo_original>
// kernel: tpu_custom_call.1
$region0: #{tpu_custom_call.1}
  #allocation0 [shape = 'u32[]', space=smem, size = 0x4, offset = 0x4, fixed_abs, tag = 'smem constant byte address 0x4 - core index']
  #allocation1 [shape = 'u32[144,128]{1,0:T(1,128)}', space=vmem, size = 0x12000, scoped, tag = 'internal scratch']
  %s0 = inlined_call_operand.hbm [shape: bf16[8,8,32], index: 0, kind: input, shape index: {}]
  %s1 = inlined_call_operand.hbm [shape: bf16[8,8,8], index: 1, kind: input, shape index: {}]
  %s2 = inlined_call_operand.hbm [shape: bf16[32,32], index: 2, kind: input, shape index: {}]
  %s3 = inlined_call_operand.vmem [shape: f32[1,32], index: 3, kind: input, shape index: {}]
  %s4 = inlined_call_operand.hbm [shape: bf16[32,128], index: 4, kind: input, shape index: {}]
  %s5 = inlined_call_operand.vmem [shape: f32[1,128], index: 5, kind: input, shape index: {}]
  %s6 = inlined_call_operand.hbm [shape: f32[64,128], index: 6, kind: output, shape index: {}]
  %s7 = sld [smem:[#allocation0]]
  $region73: #{tpu_custom_call.1} parent=0
    _
  %s9 = ssub.s32 1, %s7
  %s10 = scalar_select 0, %s9, %s7
  $region1: #{tpu_custom_call.1} parent=0
    #allocation2 [shape = 'u8[16384]{0}', space=vmem, size = 0x4000, scoped, tag = 'input window, operand 0']
    #allocation3 [shape = 's32[2]{0}', space=sflag, size = 0x8, scoped, tag = 'scoped memory for tpu_custom_call.1']
    #allocation4 [shape = 's32[2]{0}', space=sflag, size = 0x8, scoped, tag = 'scoped memory for tpu_custom_call.1']
    #allocation5 [shape = 'u8[16384]{0}', space=vmem, size = 0x4000, scoped, tag = 'input window, operand 1']
    #allocation6 [shape = 's32[2]{0}', space=sflag, size = 0x8, scoped, tag = 'scoped memory for tpu_custom_call.1']
    #allocation7 [shape = 'u8[8192]{0}', space=vmem, size = 0x2000, scoped, tag = 'input window, operand 2, single buffered']
    #allocation8 [shape = 'u8[8192]{0}', space=vmem, size = 0x2000, scoped, tag = 'input window, operand 4, single buffered']
    #allocation9 [shape = 's32[1]{0}', space=sflag, size = 0x4, scoped, tag = 'scoped memory for tpu_custom_call.1']
    #allocation10 [shape = 'u8[32768]{0}', space=vmem, size = 0x8000, scoped, tag = 'output window, operand 0']
    %11 = vsyncpa [#allocation3], 0
    %s12 = scalar_lea.sflag [#allocation3], 1
    %13 = vsyncpa %s12, 0
    %14 = vsyncpa [#allocation6], 0
    %s15 = scalar_lea.sflag [#allocation6], 1
    %16 = vsyncpa %s15, 0
    %17 = vsyncpa [#allocation9], 0
    %18 = vsyncpa [#allocation4], 0
    %s19 = scalar_lea.sflag [#allocation4], 1
    %20 = vsyncpa %s19, 0
    loop: start=0, step=1, limit=4
    $region2: #{tpu_custom_call.1} parent=1 // loop_pre_header
      _
    $region3: #{tpu_custom_call.1} parent=1 // loop_header
      %s22 = sphi 0, %s26
      %p23 = scmp.ge.s32.totalorder %s22, 4
      %s32 = sphi 0, %s34
      %s35 = sphi 0, %s32
      %s36 = sphi 0, %s35
      %s52 = sphi 0, %s36
      %s58 = sphi 0, %s60
      %s61 = sphi 0, %s58
      %s62 = sphi 0, %s61
      %s78 = sphi 0, %s62
      %s82 = sphi 0, %s82
      %s84 = sphi 0, %s82
      %s85 = sphi 0, %s84
      %s99 = sphi 0, %s85
      %s103 = sphi 0, %s103
      %s105 = sphi 0, %s103
      %s106 = sphi 0, %s105
      %s120 = sphi 0, %s106
      %s124 = sphi 0, %s124
      %s126 = sphi 0, %s124
      %s127 = sphi 0, %s126
      %s141 = sphi 0, %s127
      %s145 = sphi 0, %s145
      %s147 = sphi 0, %s145
      %s148 = sphi 0, %s147
      %s162 = sphi 0, %s148
      %s168 = sphi 0, %s170
      %s171 = sphi 0, %s168
      %s172 = sphi 0, %s171
      %s188 = sphi 0, %s172
    $region4: #{tpu_custom_call.1} parent=1 // loop_header_branch
      %25 = sbr.rel (%p23) target = $region8
    $region5: #{tpu_custom_call.1} parent=1 // loop_body
      %s27 = ssub.s32 %s22, 1
      %s28 = ssub.s32 %s22, 2
      %s29 = sadd.s32 %s22, 1
      %s30 = ssub.s32 %s22, %s29
      %p31 = scmp.eq.s32.totalorder %s30, 0
      %s33 = sadd.s32 %s32, 1
      %s34 = scalar_select %p31, %s32, %s33
      %p37 = pneg %p31
      %p38 = scmp.eq.s32.totalorder %s22, 1
      %p39 = por %p37, %p38
      %p40 = scmp.ne.s32.totalorder %s32, %s35
      %p41 = scmp.eq.s32.totalorder %s22, 0
      %p42 = por %p40, %p41
      %p43 = scmp.ne.s32.totalorder %s32, %s35
      %p44 = scmp.eq.s32.totalorder %s27, 1
      %p45 = por %p43, %p44
      %p46 = scmp.ne.s32.totalorder %s35, %s36
      %p47 = scmp.eq.s32.totalorder %s27, 0
      %p48 = por %p46, %p47
      %p49 = scmp.ne.s32.totalorder %s35, %s36
      %p50 = scmp.eq.s32.totalorder %s28, 1
      %p51 = por %p49, %p50
      %p53 = scmp.ne.s32.totalorder %s36, %s52
      %p54 = scmp.eq.s32.totalorder %s28, 0
      %p55 = por %p53, %p54
      %s56 = ssub.s32 %s22, %s29
      %p57 = scmp.eq.s32.totalorder %s56, 0
      %s59 = sadd.s32 %s58, 1
      %s60 = scalar_select %p57, %s58, %s59
      %p63 = pneg %p57
      %p64 = scmp.eq.s32.totalorder %s22, 1
      %p65 = por %p63, %p64
      %p66 = scmp.ne.s32.totalorder %s58, %s61
      %p67 = scmp.eq.s32.totalorder %s22, 0
      %p68 = por %p66, %p67
      %p69 = scmp.ne.s32.totalorder %s58, %s61
      %p70 = scmp.eq.s32.totalorder %s27, 1
      %p71 = por %p69, %p70
      %p72 = scmp.ne.s32.totalorder %s61, %s62
      %p73 = scmp.eq.s32.totalorder %s27, 0
      %p74 = por %p72, %p73
      %p75 = scmp.ne.s32.totalorder %s61, %s62
      %p76 = scmp.eq.s32.totalorder %s28, 1
      %p77 = por %p75, %p76
      %p79 = scmp.ne.s32.totalorder %s62, %s78
      %p80 = scmp.eq.s32.totalorder %s28, 0
      %p81 = por %p79, %p80
      %s83 = sadd.s32 %s82, 1
      %p86 = scmp.eq.s32.totalorder %s22, 1
      %p87 = scmp.ne.s32.totalorder %s82, %s84
      %p88 = scmp.eq.s32.totalorder %s22, 0
      %p89 = por %p87, %p88
      %p90 = scmp.ne.s32.totalorder %s82, %s84
      %p91 = scmp.eq.s32.totalorder %s27, 1
      %p92 = por %p90, %p91
      %p93 = scmp.ne.s32.totalorder %s84, %s85
      %p94 = scmp.eq.s32.totalorder %s27, 0
      %p95 = por %p93, %p94
      %p96 = scmp.ne.s32.totalorder %s84, %s85
      %p97 = scmp.eq.s32.totalorder %s28, 1
      %p98 = por %p96, %p97
      %p100 = scmp.ne.s32.totalorder %s85, %s99
      %p101 = scmp.eq.s32.totalorder %s28, 0
      %p102 = por %p100, %p101
      %s104 = sadd.s32 %s103, 1
      %p107 = scmp.eq.s32.totalorder %s22, 1
      %p108 = scmp.ne.s32.totalorder %s103, %s105
      %p109 = scmp.eq.s32.totalorder %s22, 0
      %p110 = por %p108, %p109
      %p111 = scmp.ne.s32.totalorder %s103, %s105
      %p112 = scmp.eq.s32.totalorder %s27, 1
      %p113 = por %p111, %p112
      %p114 = scmp.ne.s32.totalorder %s105, %s106
      %p115 = scmp.eq.s32.totalorder %s27, 0
      %p116 = por %p114, %p115
      %p117 = scmp.ne.s32.totalorder %s105, %s106
      %p118 = scmp.eq.s32.totalorder %s28, 1
      %p119 = por %p117, %p118
      %p121 = scmp.ne.s32.totalorder %s106, %s120
      %p122 = scmp.eq.s32.totalorder %s28, 0
      %p123 = por %p121, %p122
      %s125 = sadd.s32 %s124, 1
      %p128 = scmp.eq.s32.totalorder %s22, 1
      %p129 = scmp.ne.s32.totalorder %s124, %s126
      %p130 = scmp.eq.s32.totalorder %s22, 0
      %p131 = por %p129, %p130
      %p132 = scmp.ne.s32.totalorder %s124, %s126
      %p133 = scmp.eq.s32.totalorder %s27, 1
      %p134 = por %p132, %p133
      %p135 = scmp.ne.s32.totalorder %s126, %s127
      %p136 = scmp.eq.s32.totalorder %s27, 0
      %p137 = por %p135, %p136
      %p138 = scmp.ne.s32.totalorder %s126, %s127
      %p139 = scmp.eq.s32.totalorder %s28, 1
      %p140 = por %p138, %p139
      %p142 = scmp.ne.s32.totalorder %s127, %s141
      %p143 = scmp.eq.s32.totalorder %s28, 0
      %p144 = por %p142, %p143
      %s146 = sadd.s32 %s145, 1
      %p149 = scmp.eq.s32.totalorder %s22, 1
      %p150 = scmp.ne.s32.totalorder %s145, %s147
      %p151 = scmp.eq.s32.totalorder %s22, 0
      %p152 = por %p150, %p151
      %p153 = scmp.ne.s32.totalorder %s145, %s147
      %p154 = scmp.eq.s32.totalorder %s27, 1
      %p155 = por %p153, %p154
      %p156 = scmp.ne.s32.totalorder %s147, %s148
      %p157 = scmp.eq.s32.totalorder %s27, 0
      %p158 = por %p156, %p157
      %p159 = scmp.ne.s32.totalorder %s147, %s148
      %p160 = scmp.eq.s32.totalorder %s28, 1
      %p161 = por %p159, %p160
      %p163 = scmp.ne.s32.totalorder %s148, %s162
      %p164 = scmp.eq.s32.totalorder %s28, 0
      %p165 = por %p163, %p164
      %s166 = ssub.s32 %s22, %s29
      %p167 = scmp.eq.s32.totalorder %s166, 0
      %s169 = sadd.s32 %s168, 1
      %s170 = scalar_select %p167, %s168, %s169
      %p173 = pneg %p167
      %p174 = scmp.eq.s32.totalorder %s22, 1
      %p175 = por %p173, %p174
      %p176 = scmp.ne.s32.totalorder %s168, %s171
      %p177 = scmp.eq.s32.totalorder %s22, 0
      %p178 = por %p176, %p177
      %p179 = scmp.ne.s32.totalorder %s168, %s171
      %p180 = scmp.eq.s32.totalorder %s27, 1
      %p181 = por %p179, %p180
      %p182 = scmp.ne.s32.totalorder %s171, %s172
      %p183 = scmp.eq.s32.totalorder %s27, 0
      %p184 = por %p182, %p183
      %p185 = scmp.ne.s32.totalorder %s171, %s172
      %p186 = scmp.eq.s32.totalorder %s28, 1
      %p187 = por %p185, %p186
      %p189 = scmp.ne.s32.totalorder %s172, %s188
      %p190 = scmp.eq.s32.totalorder %s28, 0
      %p191 = por %p189, %p190
      %p192 = scmp.le.s32.totalorder 1, %s22
      %p193 = scmp.lt.s32.totalorder %s22, 3
      %p194 = pnand %p192, %p193
      %p195 = pneg %p194
      // Predicated region
      $region9: #{tpu_custom_call.1} parent=5 // pred_check
        _
      $region10: #{tpu_custom_call.1} parent=5 // pred_check_branch
        %197 = sbr.rel (%p194) target = $region12
      $region11: #{tpu_custom_call.1} parent=5 // pred_region
        %s198 = ssub.s32 %s22, 1
        // Predicated region
        $region13: #{tpu_custom_call.1} parent=11 // pred_check
          %p199 = pneg %p95
        $region14: #{tpu_custom_call.1} parent=11 // pred_check_branch
          %201 = sbr.rel (%p199) target = $region16
        $region15: #{tpu_custom_call.1} parent=11 // pred_region
          %s203 = ssub.s32 256, 256
          %204 = vsyncadd [#allocation6], %s203
          %s205 = sshll.u32 [#allocation7], 4
          %s206 = int_to_ptr.vmem [resolvable:$true] %s205
          %211 = dma.hbm_to_vmem [thread:$0]  %s2, 256, %s206, [#allocation6], 64, 64, 4
        $region16: #{tpu_custom_call.1} parent=11 // pred_fallthru
          _
        // Predicated region
        $region17: #{tpu_custom_call.1} parent=11 // pred_check
          %p212 = pneg %p116
        $region18: #{tpu_custom_call.1} parent=11 // pred_check_branch
          %214 = sbr.rel (%p212) target = $region20
        $region19: #{tpu_custom_call.1} parent=11 // pred_region
          _
        $region20: #{tpu_custom_call.1} parent=11 // pred_fallthru
          _
        // Predicated region
        $region21: #{tpu_custom_call.1} parent=11 // pred_check
          %p215 = pneg %p137
        $region22: #{tpu_custom_call.1} parent=11 // pred_check_branch
          %217 = sbr.rel (%p215) target = $region24
        $region23: #{tpu_custom_call.1} parent=11 // pred_region
          %s219 = ssub.s32 256, 256
          %220 = vsyncadd [#allocation9], %s219
          %s221 = sshll.u32 [#allocation8], 4
          %s222 = int_to_ptr.vmem [resolvable:$true] %s221
          %227 = dma.hbm_to_vmem [thread:$0]  %s4, 256, %s222, [#allocation9], 64, 64, 4
        $region24: #{tpu_custom_call.1} parent=11 // pred_fallthru
          _
        // Predicated region
        $region25: #{tpu_custom_call.1} parent=11 // pred_check
          %p228 = pneg %p158
        $region26: #{tpu_custom_call.1} parent=11 // pred_check_branch
          %230 = sbr.rel (%p228) target = $region28
        $region27: #{tpu_custom_call.1} parent=11 // pred_region
          _
        $region28: #{tpu_custom_call.1} parent=11 // pred_fallthru
          _
      $region12: #{tpu_custom_call.1} parent=5 // pred_fallthru
        _
      %p231 = scmp.lt.s32.totalorder %s22, 2
      // Predicated region
      $region29: #{tpu_custom_call.1} parent=5 // pred_check
        %p232 = pneg %p231
      $region30: #{tpu_custom_call.1} parent=5 // pred_check_branch
        %234 = sbr.rel (%p232) target = $region32
      $region31: #{tpu_custom_call.1} parent=5 // pred_region
        // Predicated region
        $region33: #{tpu_custom_call.1} parent=31 // pred_check
          %p235 = pneg %p42
        $region34: #{tpu_custom_call.1} parent=31 // pred_check_branch
          %237 = sbr.rel (%p235) target = $region36
        $region35: #{tpu_custom_call.1} parent=31 // pred_region
          %s238 = sand.u32 %s32, 1
          %s239 = scalar_lea.sflag [#allocation3], %s238
          %s240 = sand.u32 %s32, 1
          %s241 = smul.addr %s240, 16
          %s242 = scalar_lea.vmem [#allocation2], %s241
          %s243 = smul.u32 4, %s22
          %s245 = ssub.s32 256, 256
          %246 = vsyncadd %s239, %s245
          %s247 = smul.addr %s243, 64
          %s248 = scalar_lea.hbm %s0, %s247
          %s249 = sshll.u32 %s242, 4
          %s250 = int_to_ptr.vmem [resolvable:$true] %s249
          %255 = dma.hbm_to_vmem [thread:$0]  %s248, 256, %s250, %s239, 64, 64, 4
        $region36: #{tpu_custom_call.1} parent=31 // pred_fallthru
          _
        // Predicated region
        $region37: #{tpu_custom_call.1} parent=31 // pred_check
          %p256 = pneg %p68
        $region38: #{tpu_custom_call.1} parent=31 // pred_check_branch
          %258 = sbr.rel (%p256) target = $region40
        $region39: #{tpu_custom_call.1} parent=31 // pred_region
          %s259 = sand.u32 %s22, 1
          %s260 = scalar_lea.sflag [#allocation6], %s259
          %s261 = sand.u32 %s58, 1
          %s262 = smul.addr %s261, 16
          %s263 = scalar_lea.vmem [#allocation5], %s262
          %s264 = smul.u32 4, %s22
          %s266 = ssub.s32 256, 256
          %267 = vsyncadd %s260, %s266
          %s268 = smul.addr %s264, 64
          %s269 = scalar_lea.hbm %s1, %s268
          %s270 = sshll.u32 %s263, 4
          %s271 = int_to_ptr.vmem [resolvable:$true] %s270
          %276 = dma.hbm_to_vmem [thread:$0]  %s269, 256, %s271, %s260, 64, 64, 4
        $region40: #{tpu_custom_call.1} parent=31 // pred_fallthru
          _
      $region32: #{tpu_custom_call.1} parent=5 // pred_fallthru
        _
      %p277 = scmp.le.s32.totalorder 1, %s22
      %p278 = scmp.lt.s32.totalorder %s22, 3
      %p279 = pnand %p277, %p278
      %p280 = pneg %p279
      // Predicated region
      $region41: #{tpu_custom_call.1} parent=5 // pred_check
        _
      $region42: #{tpu_custom_call.1} parent=5 // pred_check_branch
        %282 = sbr.rel (%p279) target = $region44
      $region43: #{tpu_custom_call.1} parent=5 // pred_region
        %s283 = ssub.s32 %s22, 1
        %s284 = sand.u32 %s35, 1
        %s285 = scalar_lea.sflag [#allocation3], %s284
        %s286 = sand.u32 %s35, 1
        %s287 = smul.addr %s286, 16
        %s288 = scalar_lea.vmem [#allocation2], %s287
        // Predicated region
        $region45: #{tpu_custom_call.1} parent=43 // pred_check
          %p289 = pneg %p48
        $region46: #{tpu_custom_call.1} parent=43 // pred_check_branch
          %291 = sbr.rel (%p289) target = $region48
        $region47: #{tpu_custom_call.1} parent=43 // pred_region
          %292 = dma.done %s285, 256
        $region48: #{tpu_custom_call.1} parent=43 // pred_fallthru
          _
        %s293 = sand.u32 %s27, 1
        %s294 = scalar_lea.sflag [#allocation6], %s293
        %s295 = sand.u32 %s61, 1
        %s296 = smul.addr %s295, 16
        %s297 = scalar_lea.vmem [#allocation5], %s296
        // Predicated region
        $region49: #{tpu_custom_call.1} parent=43 // pred_check
          %p298 = pneg %p74
        $region50: #{tpu_custom_call.1} parent=43 // pred_check_branch
          %300 = sbr.rel (%p298) target = $region52
        $region51: #{tpu_custom_call.1} parent=43 // pred_region
          %301 = dma.done %s294, 256
        $region52: #{tpu_custom_call.1} parent=43 // pred_fallthru
          _
        // Predicated region
        $region53: #{tpu_custom_call.1} parent=43 // pred_check
          %p302 = pneg %p95
        $region54: #{tpu_custom_call.1} parent=43 // pred_check_branch
          %304 = sbr.rel (%p302) target = $region56
        $region55: #{tpu_custom_call.1} parent=43 // pred_region
          %305 = dma.done [#allocation6], 256
        $region56: #{tpu_custom_call.1} parent=43 // pred_fallthru
          _
        // Predicated region
        $region57: #{tpu_custom_call.1} parent=43 // pred_check
          %p306 = pneg %p137
        $region58: #{tpu_custom_call.1} parent=43 // pred_check_branch
          %308 = sbr.rel (%p306) target = $region60
        $region59: #{tpu_custom_call.1} parent=43 // pred_region
          %309 = dma.done [#allocation9], 256
        $region60: #{tpu_custom_call.1} parent=43 // pred_fallthru
          _
        %s310 = sand.u32 %s35, 1
        %s311 = scalar_lea.sflag [#allocation3], %s310
        %s312 = sand.u32 %s35, 1
        %s313 = smul.addr %s312, 16
        %s314 = scalar_lea.vmem [#allocation2], %s313
        %p315 = pneg %p48
        %p316 = pneg %p45
        %s317 = sand.u32 %s27, 1
        %s318 = scalar_lea.sflag [#allocation6], %s317
        %s319 = sand.u32 %s61, 1
        %s320 = smul.addr %s319, 16
        %s321 = scalar_lea.vmem [#allocation5], %s320
        %p322 = pneg %p74
        %p323 = pneg %p71
        %p324 = pneg %p95
        %p325 = pneg %p92
        %p326 = pneg %p116
        %p327 = pneg %p113
        %p328 = pneg %p137
        %p329 = pneg %p134
        %p330 = pneg %p158
        %p331 = pneg %p155
        %p332 = pneg %p184
        %p333 = pneg %p181
        %s334 = sand.u32 %s171, 1
        %s335 = scalar_lea.sflag [#allocation4], %s334
        %s336 = sand.u32 %s171, 1
        %s337 = smul.addr %s336, 32
        %s338 = scalar_lea.vmem [#allocation10], %s337
        %s339 = smul.u32 4, %s27
        %s340 = smul.u32 4, %s27
        %s341 = smul.u32 4, %s27
        %v343 = vld [vmem:[%s288] sm:$0xf]
        %v344 = vld [vmem:[%s288 + $0x4] sm:$0xf]
        %v345 = vld [vmem:[%s288 + $0x8] sm:$0xf]
        %v346 = vld [vmem:[%s288 + $0xc] sm:$0xf]
        %v347 = vld [vmem:[%s297] sm:$0xf]
        %v348 = vld [vmem:[%s297 + $0x4] sm:$0xf]
        %v349 = vld [vmem:[%s297 + $0x8] sm:$0xf]
        %v350 = vld [vmem:[%s297 + $0xc] sm:$0xf]
        %v351 = vld [vmem:[#allocation7] sm:$0xf]
        %v352 = vld [vmem:[#allocation7 + $0x4] sm:$0xf]
        %v353 = vld [vmem:[#allocation7 + $0x8] sm:$0xf]
        %v354 = vld [vmem:[#allocation7 + $0xc] sm:$0xf]
        %v355 = vld [vmem:[%s3] sm:$0x1]
        %v357 = vlaneseq
        %v358 = vshrl.u32 %v357, 7
        %v359 = vsub.s32 0, %v358
        %v360 = vrot.slane %v355, %v359
        %v366 = vunpack.c.l.b16 %v343
        %v367 = vunpack.c.l.b16 %v344
        %v368 = vunpack.c.l.b16 %v345
        %v369 = vunpack.c.l.b16 %v346
        %v370 = vpack.c.b16 %v367, %v366
        %v371 = vpack.c.b16 %v369, %v368
        %v376 = vunpack.c.l.b16 %v351
        %v377 = vunpack.c.l.b16 %v352
        %v378 = vunpack.c.l.b16 %v353
        %v379 = vunpack.c.l.b16 %v354
        %v380 = vpack.c.b16 %v377, %v376
        %v381 = vpack.c.b16 %v379, %v378
        %vm384 = vcmask 261120
        %v386 = vsel %vm384, %v370, 0
        %v389 = vsel %vm384, %v371, 0
        %391 = vmatprep.subr.bf16.mxu0 0
        %392 = vmatpush1.bf16.msra.mxu0 %v380
        %393 = vmatprep.subr.bf16.mxu0 0
        %394 = vmatpush1.bf16.msra.mxu0 %v381
        %395 = vmatprep.subr.bf16.mxu0 0
        %396 = vmatpush1.bf16.msra.mxu0 0
        %397 = vmatprep.subr.bf16.mxu0 0
        %398 = vmatpush1.bf16.msra.mxu0 0
        %399 = vmatprep.subr.bf16.mxu0 0
        %400 = vmatpush1.bf16.msra.mxu0 0
        %401 = vmatprep.subr.bf16.mxu0 0
        %402 = vmatpush1.bf16.msra.mxu0 0
        %403 = vmatprep.subr.bf16.mxu0 0
        %404 = vmatpush1.bf16.msra.mxu0 0
        %405 = vmatprep.subr.bf16.mxu0 0
        %406 = vmatpush1.bf16.msra.mxu0 0
        %407 = vmatprep.subr.bf16.mxu0 0
        %408 = vmatpush1.bf16.msra.mxu0 0
        %409 = vmatprep.subr.bf16.mxu0 0
        %410 = vmatpush1.bf16.msra.mxu0 0
        %411 = vmatprep.subr.bf16.mxu0 0
        %412 = vmatpush1.bf16.msra.mxu0 0
        %413 = vmatprep.subr.bf16.mxu0 0
        %414 = vmatpush1.bf16.msra.mxu0 0
        %415 = vmatprep.subr.bf16.mxu0 0
        %416 = vmatpush1.bf16.msra.mxu0 0
        %417 = vmatprep.subr.bf16.mxu0 0
        %418 = vmatpush1.bf16.msra.mxu0 0
        %419 = vmatprep.subr.bf16.mxu0 0
        %420 = vmatpush1.bf16.msra.mxu0 0
        %421 = vmatprep.subr.bf16.mxu0 0
        %422 = vmatpush1.bf16.msra.mxu0 0
        %423 = vmatprep.mubr.bf16.mxu0 0
        %424 = vmatmul.mubr.bf16.gmra.mrb[0].mxu0 %v386
        %v425 = vpop.f32.mrb[0].mxu0
        %v426 = vadd.f32 %v360, %v425
        %v427 = vpop.f32.mrb[0].mxu0
        %v428 = vpop.f32.mrb[0].mxu0
        %v429 = vadd.f32 %v360, %v428
        %v430 = vpop.f32.mrb[0].mxu0
        %431 = vmatprep.mubr.bf16.mxu0 0
        %432 = vmatmul.mubr.bf16.gmra.mrb[0].mxu0 %v389
        %v433 = vpop.f32.mrb[0].mxu0
        %v434 = vadd.f32 %v360, %v433
        %v435 = vpop.f32.mrb[0].mxu0
        %v436 = vpop.f32.mrb[0].mxu0
        %v437 = vadd.f32 %v360, %v436
        %v438 = vpop.f32.mrb[0].mxu0
        %439 = vdwg.mxu0
        %v440 = vpack.c.bf16 %v426, %v426
        %v441 = vpack.c.bf16 %v429, %v429
        %v442 = vpack.c.bf16 %v434, %v434
        %v443 = vpack.c.bf16 %v437, %v437
        %vm444 = vcmask 64512
        %v446 = vsel %vm444, %v347, 0
        %vm448 = vcmask 1043456
        %v450 = vsel %vm448, %v440, 0
        %452 = vmatprep.subr.bf16.mxu0 0
        %453 = vmatpush1.bf16.msra.mxu0 %v450
        %454 = vmatprep.subr.bf16.mxu0 0
        %455 = vmatpush1.bf16.msra.mxu0 0
        %456 = vmatprep.subr.bf16.mxu0 0
        %457 = vmatpush1.bf16.msra.mxu0 0
        %458 = vmatprep.subr.bf16.mxu0 0
        %459 = vmatpush1.bf16.msra.mxu0 0
        %460 = vmatprep.subr.bf16.mxu0 0
        %461 = vmatpush1.bf16.msra.mxu0 0
        %462 = vmatprep.subr.bf16.mxu0 0
        %463 = vmatpush1.bf16.msra.mxu0 0
        %464 = vmatprep.subr.bf16.mxu0 0
        %465 = vmatpush1.bf16.msra.mxu0 0
        %466 = vmatprep.subr.bf16.mxu0 0
        %467 = vmatpush1.bf16.msra.mxu0 0
        %468 = vmatprep.subr.bf16.mxu0 0
        %469 = vmatpush1.bf16.msra.mxu0 0
        %470 = vmatprep.subr.bf16.mxu0 0
        %471 = vmatpush1.bf16.msra.mxu0 0
        %472 = vmatprep.subr.bf16.mxu0 0
        %473 = vmatpush1.bf16.msra.mxu0 0
        %474 = vmatprep.subr.bf16.mxu0 0
        %475 = vmatpush1.bf16.msra.mxu0 0
        %476 = vmatprep.subr.bf16.mxu0 0
        %477 = vmatpush1.bf16.msra.mxu0 0
        %478 = vmatprep.subr.bf16.mxu0 0
        %479 = vmatpush1.bf16.msra.mxu0 0
        %480 = vmatprep.subr.bf16.mxu0 0
        %481 = vmatpush1.bf16.msra.mxu0 0
        %482 = vmatprep.subr.bf16.mxu0 0
        %483 = vmatpush1.bf16.msra.mxu0 0
        %484 = vmatprep.mubr.bf16.mxu0 0
        %485 = vmatmul.mubr.bf16.gmra.mrb[0].mxu0 %v446
        %v486 = vpop.f32.mrb[0].mxu0
        %v487 = vadd.f32 0.0, %v486
        %v488 = vpop.f32.mrb[0].mxu0
        %v489 = vpop.f32.mrb[0].mxu0
        %v490 = vpop.f32.mrb[0].mxu0
        %491 = vdwg.mxu0
        %v493 = vsel %vm444, %v348, 0
        %v496 = vsel %vm448, %v441, 0
        %498 = vmatprep.subr.bf16.mxu0 0
        %499 = vmatpush1.bf16.msra.mxu0 %v496
        %500 = vmatprep.subr.bf16.mxu0 0
        %501 = vmatpush1.bf16.msra.mxu0 0
        %502 = vmatprep.subr.bf16.mxu0 0
        %503 = vmatpush1.bf16.msra.mxu0 0
        %504 = vmatprep.subr.bf16.mxu0 0
        %505 = vmatpush1.bf16.msra.mxu0 0
        %506 = vmatprep.subr.bf16.mxu0 0
        %507 = vmatpush1.bf16.msra.mxu0 0
        %508 = vmatprep.subr.bf16.mxu0 0
        %509 = vmatpush1.bf16.msra.mxu0 0
        %510 = vmatprep.subr.bf16.mxu0 0
        %511 = vmatpush1.bf16.msra.mxu0 0
        %512 = vmatprep.subr.bf16.mxu0 0
        %513 = vmatpush1.bf16.msra.mxu0 0
        %514 = vmatprep.subr.bf16.mxu0 0
        %515 = vmatpush1.bf16.msra.mxu0 0
        %516 = vmatprep.subr.bf16.mxu0 0
        %517 = vmatpush1.bf16.msra.mxu0 0
        %518 = vmatprep.subr.bf16.mxu0 0
        %519 = vmatpush1.bf16.msra.mxu0 0
        %520 = vmatprep.subr.bf16.mxu0 0
        %521 = vmatpush1.bf16.msra.mxu0 0
        %522 = vmatprep.subr.bf16.mxu0 0
        %523 = vmatpush1.bf16.msra.mxu0 0
        %524 = vmatprep.subr.bf16.mxu0 0
        %525 = vmatpush1.bf16.msra.mxu0 0
        %526 = vmatprep.subr.bf16.mxu0 0
        %527 = vmatpush1.bf16.msra.mxu0 0
        %528 = vmatprep.subr.bf16.mxu0 0
        %529 = vmatpush1.bf16.msra.mxu0 0
        %530 = vmatprep.mubr.bf16.mxu0 0
        %531 = vmatmul.mubr.bf16.gmra.mrb[0].mxu0 %v493
        %v532 = vpop.f32.mrb[0].mxu0
        %v533 = vadd.f32 0.0, %v532
        %v534 = vpop.f32.mrb[0].mxu0
        %v535 = vpop.f32.mrb[0].mxu0
        %v536 = vpop.f32.mrb[0].mxu0
        %537 = vdwg.mxu0
        %v539 = vsel %vm444, %v349, 0
        %v542 = vsel %vm448, %v442, 0
        %544 = vmatprep.subr.bf16.mxu0 0
        %545 = vmatpush1.bf16.msra.mxu0 %v542
        %546 = vmatprep.subr.bf16.mxu0 0
        %547 = vmatpush1.bf16.msra.mxu0 0
        %548 = vmatprep.subr.bf16.mxu0 0
        %549 = vmatpush1.bf16.msra.mxu0 0
        %550 = vmatprep.subr.bf16.mxu0 0
        %551 = vmatpush1.bf16.msra.mxu0 0
        %552 = vmatprep.subr.bf16.mxu0 0
        %553 = vmatpush1.bf16.msra.mxu0 0
        %554 = vmatprep.subr.bf16.mxu0 0
        %555 = vmatpush1.bf16.msra.mxu0 0
        %556 = vmatprep.subr.bf16.mxu0 0
        %557 = vmatpush1.bf16.msra.mxu0 0
        %558 = vmatprep.subr.bf16.mxu0 0
        %559 = vmatpush1.bf16.msra.mxu0 0
        %560 = vmatprep.subr.bf16.mxu0 0
        %561 = vmatpush1.bf16.msra.mxu0 0
        %562 = vmatprep.subr.bf16.mxu0 0
        %563 = vmatpush1.bf16.msra.mxu0 0
        %564 = vmatprep.subr.bf16.mxu0 0
        %565 = vmatpush1.bf16.msra.mxu0 0
        %566 = vmatprep.subr.bf16.mxu0 0
        %567 = vmatpush1.bf16.msra.mxu0 0
        %568 = vmatprep.subr.bf16.mxu0 0
        %569 = vmatpush1.bf16.msra.mxu0 0
        %570 = vmatprep.subr.bf16.mxu0 0
        %571 = vmatpush1.bf16.msra.mxu0 0
        %572 = vmatprep.subr.bf16.mxu0 0
        %573 = vmatpush1.bf16.msra.mxu0 0
        %574 = vmatprep.subr.bf16.mxu0 0
        %575 = vmatpush1.bf16.msra.mxu0 0
        %576 = vmatprep.mubr.bf16.mxu0 0
        %577 = vmatmul.mubr.bf16.gmra.mrb[0].mxu0 %v539
        %v578 = vpop.f32.mrb[0].mxu0
        %v579 = vadd.f32 0.0, %v578
        %v580 = vpop.f32.mrb[0].mxu0
        %v581 = vpop.f32.mrb[0].mxu0
        %v582 = vpop.f32.mrb[0].mxu0
        %583 = vdwg.mxu0
        %v585 = vsel %vm444, %v350, 0
        %v588 = vsel %vm448, %v443, 0
        %590 = vmatprep.subr.bf16.mxu0 0
        %591 = vmatpush1.bf16.msra.mxu0 %v588
        %592 = vmatprep.subr.bf16.mxu0 0
        %593 = vmatpush1.bf16.msra.mxu0 0
        %594 = vmatprep.subr.bf16.mxu0 0
        %595 = vmatpush1.bf16.msra.mxu0 0
        %596 = vmatprep.subr.bf16.mxu0 0
        %597 = vmatpush1.bf16.msra.mxu0 0
        %598 = vmatprep.subr.bf16.mxu0 0
        %599 = vmatpush1.bf16.msra.mxu0 0
        %600 = vmatprep.subr.bf16.mxu0 0
        %601 = vmatpush1.bf16.msra.mxu0 0
        %602 = vmatprep.subr.bf16.mxu0 0
        %603 = vmatpush1.bf16.msra.mxu0 0
        %604 = vmatprep.subr.bf16.mxu0 0
        %605 = vmatpush1.bf16.msra.mxu0 0
        %606 = vmatprep.subr.bf16.mxu0 0
        %607 = vmatpush1.bf16.msra.mxu0 0
        %608 = vmatprep.subr.bf16.mxu0 0
        %609 = vmatpush1.bf16.msra.mxu0 0
        %610 = vmatprep.subr.bf16.mxu0 0
        %611 = vmatpush1.bf16.msra.mxu0 0
        %612 = vmatprep.subr.bf16.mxu0 0
        %613 = vmatpush1.bf16.msra.mxu0 0
        %614 = vmatprep.subr.bf16.mxu0 0
        %615 = vmatpush1.bf16.msra.mxu0 0
        %616 = vmatprep.subr.bf16.mxu0 0
        %617 = vmatpush1.bf16.msra.mxu0 0
        %618 = vmatprep.subr.bf16.mxu0 0
        %619 = vmatpush1.bf16.msra.mxu0 0
        %620 = vmatprep.subr.bf16.mxu0 0
        %621 = vmatpush1.bf16.msra.mxu0 0
        %622 = vmatprep.mubr.bf16.mxu0 0
        %623 = vmatmul.mubr.bf16.gmra.mrb[0].mxu0 %v585
        %v624 = vpop.f32.mrb[0].mxu0
        %v625 = vadd.f32 0.0, %v624
        %v626 = vpop.f32.mrb[0].mxu0
        %v627 = vpop.f32.mrb[0].mxu0
        %v628 = vpop.f32.mrb[0].mxu0
        %629 = vdwg.mxu0
        %v630 = vmax.f32 %v487, 0.0
        %v631 = vmax.f32 %v533, 0.0
        %v632 = vmax.f32 %v579, 0.0
        %v633 = vmax.f32 %v625, 0.0
        %v634 = vpack.c.bf16 %v631, %v630
        %v635 = vpack.c.bf16 %v633, %v632
        %v636 = vld [vmem:[#allocation8] sm:$0xf]
        %v637 = vld [vmem:[#allocation8 + $0x4] sm:$0xf]
        %v638 = vld [vmem:[#allocation8 + $0x8] sm:$0xf]
        %v639 = vld [vmem:[#allocation8 + $0xc] sm:$0xf]
        %v640 = vld [vmem:[%s5] sm:$0x1]
        %v642 = vlaneseq
        %v643 = vshrl.u32 %v642, 7
        %v644 = vsub.s32 0, %v643
        %v645 = vrot.slane %v640, %v644
        %v651 = vunpack.c.l.b16 %v636
        %v652 = vunpack.c.l.b16 %v637
        %v653 = vunpack.c.l.b16 %v638
        %v654 = vunpack.c.l.b16 %v639
        %v655 = vpack.c.b16 %v652, %v651
        %v656 = vpack.c.b16 %v654, %v653
        %v660 = vsel %vm384, %v634, 0
        %v663 = vsel %vm384, %v635, 0
        %665 = vmatprep.subr.bf16.mxu0 0
        %666 = vmatpush1.bf16.msra.mxu0 %v655
        %667 = vmatprep.subr.bf16.mxu0 0
        %668 = vmatpush1.bf16.msra.mxu0 %v656
        %669 = vmatprep.subr.bf16.mxu0 0
        %670 = vmatpush1.bf16.msra.mxu0 0
        %671 = vmatprep.subr.bf16.mxu0 0
        %672 = vmatpush1.bf16.msra.mxu0 0
        %673 = vmatprep.subr.bf16.mxu0 0
        %674 = vmatpush1.bf16.msra.mxu0 0
        %675 = vmatprep.subr.bf16.mxu0 0
        %676 = vmatpush1.bf16.msra.mxu0 0
        %677 = vmatprep.subr.bf16.mxu0 0
        %678 = vmatpush1.bf16.msra.mxu0 0
        %679 = vmatprep.subr.bf16.mxu0 0
        %680 = vmatpush1.bf16.msra.mxu0 0
        %681 = vmatprep.subr.bf16.mxu0 0
        %682 = vmatpush1.bf16.msra.mxu0 0
        %683 = vmatprep.subr.bf16.mxu0 0
        %684 = vmatpush1.bf16.msra.mxu0 0
        %685 = vmatprep.subr.bf16.mxu0 0
        %686 = vmatpush1.bf16.msra.mxu0 0
        %687 = vmatprep.subr.bf16.mxu0 0
        %688 = vmatpush1.bf16.msra.mxu0 0
        %689 = vmatprep.subr.bf16.mxu0 0
        %690 = vmatpush1.bf16.msra.mxu0 0
        %691 = vmatprep.subr.bf16.mxu0 0
        %692 = vmatpush1.bf16.msra.mxu0 0
        %693 = vmatprep.subr.bf16.mxu0 0
        %694 = vmatpush1.bf16.msra.mxu0 0
        %695 = vmatprep.subr.bf16.mxu0 0
        %696 = vmatpush1.bf16.msra.mxu0 0
        %697 = vmatprep.mubr.bf16.mxu0 0
        %698 = vmatmul.mubr.bf16.gmra.mrb[0].mxu0 %v660
        %v699 = vpop.f32.mrb[0].mxu0
        %v700 = vadd.f32 %v645, %v699
        %v701 = vpop.f32.mrb[0].mxu0
        %v702 = vpop.f32.mrb[0].mxu0
        %v703 = vadd.f32 %v645, %v702
        %v704 = vpop.f32.mrb[0].mxu0
        %705 = vmatprep.mubr.bf16.mxu0 0
        %706 = vmatmul.mubr.bf16.gmra.mrb[0].mxu0 %v663
        %v707 = vpop.f32.mrb[0].mxu0
        %v708 = vadd.f32 %v645, %v707
        %v709 = vpop.f32.mrb[0].mxu0
        %v710 = vpop.f32.mrb[0].mxu0
        %v711 = vadd.f32 %v645, %v710
        %v712 = vpop.f32.mrb[0].mxu0
        %713 = vdwg.mxu0
        %v714 = vmax.f32 %v700, 0.0
        %v715 = vmax.f32 %v703, 0.0
        %v716 = vmax.f32 %v708, 0.0
        %v717 = vmax.f32 %v711, 0.0
        %718 = vst [vmem:[%s338] sm:$0xff] %v714
        %719 = vst [vmem:[%s338 + $0x8] sm:$0xff] %v715
        %720 = vst [vmem:[%s338 + $0x10] sm:$0xff] %v716
        %721 = vst [vmem:[%s338 + $0x18] sm:$0xff] %v717
        %s722 = sand.u32 %s171, 1
        %s723 = scalar_lea.sflag [#allocation4], %s722
        %s724 = sand.u32 %s171, 1
        %s725 = smul.addr %s724, 32
        %s726 = scalar_lea.vmem [#allocation10], %s725
        // Predicated region
        $region61: #{tpu_custom_call.1} parent=43 // pred_check
          %p727 = pneg %p181
        $region62: #{tpu_custom_call.1} parent=43 // pred_check_branch
          %729 = sbr.rel (%p727) target = $region64
        $region63: #{tpu_custom_call.1} parent=43 // pred_region
          %s730 = smul.u32 4, %s27
          %s732 = ssub.s32 512, 512
          %733 = vsyncadd %s723, %s732
          %s734 = smul.addr %s730, 128
          %s735 = scalar_lea.hbm %s6, %s734
          %s736 = sshll.u32 %s726, 4
          %s737 = int_to_ptr.vmem [resolvable:$true] %s736
          %742 = dma.vmem_to_hbm [thread:$0]  %s737, 512, %s735, %s723, 128, 128, 8
        $region64: #{tpu_custom_call.1} parent=43 // pred_fallthru
          _
      $region44: #{tpu_custom_call.1} parent=5 // pred_fallthru
        _
      %p743 = scmp.le.s32.totalorder 2, %s22
      // Predicated region
      $region65: #{tpu_custom_call.1} parent=5 // pred_check
        %p744 = pneg %p743
      $region66: #{tpu_custom_call.1} parent=5 // pred_check_branch
        %746 = sbr.rel (%p744) target = $region68
      $region67: #{tpu_custom_call.1} parent=5 // pred_region
        %s747 = ssub.s32 %s22, 2
        // Predicated region
        $region69: #{tpu_custom_call.1} parent=67 // pred_check
          %p748 = pneg %p187
        $region70: #{tpu_custom_call.1} parent=67 // pred_check_branch
          %750 = sbr.rel (%p748) target = $region72
        $region71: #{tpu_custom_call.1} parent=67 // pred_region
          %s751 = sand.u32 %s172, 1
          %s752 = scalar_lea.sflag [#allocation4], %s751
          %s753 = sand.u32 %s172, 1
          %s754 = smul.addr %s753, 32
          %s755 = scalar_lea.vmem [#allocation10], %s754
          %756 = dma.done %s752, 512
        $region72: #{tpu_custom_call.1} parent=67 // pred_fallthru
          _
      $region68: #{tpu_custom_call.1} parent=5 // pred_fallthru
        _
    $region6: #{tpu_custom_call.1} parent=1 // loop_footer
      %s26 = sadd.s32 1, %s22
    $region7: #{tpu_custom_call.1} parent=1 // loop_footer_branch
      %21 = sbr.rel target = $region3
    $region8: #{tpu_custom_call.1} parent=1 // loop_exit
      _
    %757 = vsyncpa [#allocation3], 1
    %s758 = scalar_lea.sflag [#allocation3], 1
    %759 = vsyncpa %s758, 1
    %760 = vsyncpa [#allocation6], 1
    %s761 = scalar_lea.sflag [#allocation6], 1
    %762 = vsyncpa %s761, 1
    %763 = vsyncpa [#allocation9], 1
    %764 = vsyncpa [#allocation4], 1
    %s765 = scalar_lea.sflag [#allocation4], 1
    %766 = vsyncpa %s765, 1

</llo_original>
